<compile_context>
chip_gen: v5e
topology: v5e:2x2
jax: 0.10.0
libtpu: 0.0.40
codegen_flags: <defaults>
</compile_context>

<pallas_src>
import functools

import jax
import jax.numpy as jnp
from jax.experimental import pallas as pl
from jax.experimental.pallas import tpu as pltpu


def _mlp_kernel(x_ref, w_ref, b_ref, o_ref):
    # ReLU on the input tile (VPU).
    xr = jnp.maximum(x_ref[...], 0.0)
    # Single collapsed affine map: (TB, D_in) @ (D_in, O_c) + (1, O_c), f32 accum.
    y = jnp.dot(xr, w_ref[...], preferred_element_type=jnp.float32) + b_ref[...]
    # Final ReLU; store only the true O columns (padded lanes never leave VMEM).
    o = o_ref.shape[-1]
    o_ref[...] = jnp.maximum(y[:, :o], 0.0).astype(o_ref.dtype)


def _round_up(v, m):
    return ((v + m - 1) // m) * m


@functools.partial(jax.jit, static_argnames=("block_batch",))
def model_regression_forward(x, w1, b1, w2, b2, *, block_batch=4096):
    """x: (B, D_in) f32; w1: (D_in, H); b1: (1, H); w2: (H, O); b2: (1, O).

    Weights are stored pre-transposed (in_features, out_features) relative to
    torch.nn.Linear's (out, in) layout.
    """
    B, D_in = x.shape
    H, O = w2.shape

    # --- collapse the two activation-free linears (tiny, done by XLA once) ---
    w_eff = jnp.dot(w1, w2, precision=jax.lax.Precision.HIGHEST)          # (D_in, O)
    b_eff = jnp.dot(b1, w2, precision=jax.lax.Precision.HIGHEST) + b2     # (1, O)

    # --- lane-pad only the VMEM-resident weights (output stays width O) ---
    O_c = max(128, _round_up(O, 128))
    if O_c != O:
        w_eff = jnp.zeros((D_in, O_c), jnp.float32).at[:, :O].set(w_eff)
        b_eff = jnp.zeros((1, O_c), jnp.float32).at[:, :O].set(b_eff)

    # --- degenerate tiny batch: pad to one 8-row sublane tile (cheap) ---
    B_orig = B
    if B < 8:
        x = jnp.zeros((8, D_in), x.dtype).at[:B, :].set(x)
        B = 8

    # --- choose the batch tile ---
    TB = _round_up(min(block_batch, _round_up(B, 8)), 8)
    # Keep >= 2 grid steps for moderate/large B so v7x's two TensorCores can
    # both work on the "parallel" batch axis.
    if B > 8 and pl.cdiv(B, TB) < 2:
        TB = max(8, _round_up(pl.cdiv(B, 2), 8))
    # Shrink TB until double-buffered x/out tiles fit a conservative budget.
    tile_budget = 12 * 1024 * 1024
    while TB > 8 and 2 * 4 * TB * (D_in + O) > tile_budget:
        TB = max(8, _round_up(TB // 2, 8))

    grid = (pl.cdiv(B, TB),)

    # --- VMEM limit: raise only when needed; clamp below v7x physical VMEM ---
    resident = 4 * (D_in * O_c + O_c)
    footprint = resident + 2 * 4 * TB * (D_in + O)
    v5e_scoped_default = 16 * 1024 * 1024
    vmem_limit = None
    if footprint > v5e_scoped_default // 2:
        vmem_limit = min(_round_up(2 * footprint, 1 << 20), 48 * 1024 * 1024)

    flops = 2 * B * D_in * O_c + 2 * B * (D_in + O)
    bytes_accessed = 4 * (B * D_in + D_in * O_c + O_c + B * O)

    out = pl.pallas_call(
        _mlp_kernel,
        out_shape=jax.ShapeDtypeStruct((B, O), jnp.float32),
        grid=grid,
        in_specs=[
            pl.BlockSpec((TB, D_in), lambda i: (i, 0)),    # x: tiled over batch
            pl.BlockSpec((D_in, O_c), lambda i: (0, 0)),   # W_eff: VMEM-resident
            pl.BlockSpec((1, O_c), lambda i: (0, 0)),      # b_eff: VMEM-resident
        ],
        out_specs=pl.BlockSpec((TB, O), lambda i: (i, 0)),
        compiler_params=pltpu.CompilerParams(
            dimension_semantics=("parallel",),
            vmem_limit_bytes=vmem_limit,
        ),
        cost_estimate=pl.CostEstimate(
            flops=flops, bytes_accessed=bytes_accessed, transcendentals=0),
    )(x, w_eff, b_eff)

    if B_orig != B:
        out = out[:B_orig]
    return out


def init_params(key, number_input, number_hidden, number_output=1):
    """Deterministic init mimicking torch.nn.Linear (uniform +-1/sqrt(fan_in))."""
    k1, k2, k3, k4 = jax.random.split(key, 4)
    lim1 = 1.0 / jnp.sqrt(jnp.float32(number_input))
    lim2 = 1.0 / jnp.sqrt(jnp.float32(number_hidden))
    # stored as (in, out) = W^T relative to PyTorch's (out, in)
    w1 = jax.random.uniform(k1, (number_input, number_hidden), jnp.float32, -lim1, lim1)
    b1 = jax.random.uniform(k2, (1, number_hidden), jnp.float32, -lim1, lim1)
    w2 = jax.random.uniform(k3, (number_hidden, number_output), jnp.float32, -lim2, lim2)
    b2 = jax.random.uniform(k4, (1, number_output), jnp.float32, -lim2, lim2)
    return w1, b1, w2, b2


def reference_forward(x, w1, b1, w2, b2):
    h = jnp.maximum(x, 0.0) @ w1 + b1     # reg(relu(x))
    y = h @ w2 + b2                       # reg2(h)
    return jnp.maximum(y, 0.0)            # final relu


if __name__ == "__main__":
    key = jax.random.PRNGKey(0)
    kx1, kx2, kx3, kp = jax.random.split(key, 4)

    number_input = 32
    number_hidden = 64
    number_output = 1
    w1, b1, w2, b2 = init_params(kp, number_input, number_hidden, number_output)

    # batch=8 (single aligned tile), batch=13 (ragged last block, >=2 grid steps),
    # batch=2 (sub-sublane padding path).
    for batch, kk in ((8, kx1), (13, kx2), (2, kx3)):
        x = jax.random.normal(kk, (batch, number_input), jnp.float32)
        out = jax.block_until_ready(model_regression_forward(x, w1, b1, w2, b2))
        ref = reference_forward(x, w1, b1, w2, b2)
        assert out.shape == (batch, number_output)
        assert jnp.allclose(out, ref, atol=1e-4, rtol=1e-4), f"mismatch vs reference (batch={batch})"

    print("KERNEL_OK")
</pallas_src>

<mosaic_0001>
module attributes {stable_mosaic.version = 11 : i64} {
  func.func @_mlp_kernel(%arg0: i32, %arg1: memref<8x32xf32, #tpu.memory_space<vmem>>, %arg2: memref<32x128xf32, #tpu.memory_space<vmem>>, %arg3: memref<1x128xf32, #tpu.memory_space<vmem>>, %arg4: memref<8x1xf32, #tpu.memory_space<vmem>>) attributes {dimension_semantics = [#tpu.dimension_semantics<parallel>], iteration_bounds = array<i64: 1>, scalar_prefetch = 0 : i64, scratch_operands = 0 : i64, tpu.core_type = #tpu.core_type<tc>, window_params = [{transform_indices = @transform_0, window_bounds = array<i64: 8, 32>}, {pipeline_mode = #tpu.pipeline_mode<synchronous>, transform_indices = @transform_1, window_bounds = array<i64: 32, 128>}, {pipeline_mode = #tpu.pipeline_mode<synchronous>, transform_indices = @transform_2, window_bounds = array<i64: 1, 128>}, {transform_indices = @transform_3, window_bounds = array<i64: 8, 1>}]} {
    %c0 = arith.constant 0 : index
    %c0_0 = arith.constant 0 : index
    %0 = vector.load %arg1[%c0, %c0_0] : memref<8x32xf32, #tpu.memory_space<vmem>>, vector<8x32xf32>
    %cst = arith.constant 0.000000e+00 : f32
    %1 = vector.broadcast %cst : f32 to vector<8x32xf32>
    %2 = arith.maximumf %0, %1 : vector<8x32xf32>
    %c0_1 = arith.constant 0 : index
    %c0_2 = arith.constant 0 : index
    %3 = vector.load %arg2[%c0_1, %c0_2] : memref<32x128xf32, #tpu.memory_space<vmem>>, vector<32x128xf32>
    %cst_3 = arith.constant dense<0.000000e+00> : vector<8x128xf32>
    %4 = tpu.matmul %2, %3, %cst_3 {dimension_numbers = #tpu.dot_dimension_numbers<[1], [0], [0], [1], [0, 0, 1, 1], [], []>} : vector<8x32xf32>, vector<32x128xf32>, vector<8x128xf32> -> vector<8x128xf32>
    %c0_4 = arith.constant 0 : index
    %c0_5 = arith.constant 0 : index
    %5 = vector.load %arg3[%c0_4, %c0_5] : memref<1x128xf32, #tpu.memory_space<vmem>>, vector<1x128xf32>
    %6 = vector.broadcast %5 : vector<1x128xf32> to vector<8x128xf32>
    %7 = arith.addf %4, %6 : vector<8x128xf32>
    %8 = vector.extract_strided_slice %7 {offsets = [0, 0], sizes = [8, 1], strides = [1, 1]} : vector<8x128xf32> to vector<8x1xf32>
    %cst_6 = arith.constant 0.000000e+00 : f32
    %9 = vector.broadcast %cst_6 : f32 to vector<8x1xf32>
    %10 = arith.maximumf %8, %9 : vector<8x1xf32>
    %c0_7 = arith.constant 0 : index
    %c0_8 = arith.constant 0 : index
    %11 = vector.load %arg4[%c0_7, %c0_8] : memref<8x1xf32, #tpu.memory_space<vmem>>, vector<8x1xf32>
    tpu.vector_store %arg4[%c0_7, %c0_8], %10 {strides = array<i32>} : memref<8x1xf32, #tpu.memory_space<vmem>>, vector<8x1xf32>,
    return
  }
  func.func @transform_0(%arg0: i32) -> (i32, i32) {
    %c0_i32 = arith.constant 0 : i32
    %c0_i32_0 = arith.constant 0 : i32
    return %arg0, %c0_i32 : i32, i32
  }
  func.func @transform_1(%arg0: i32) -> (i32, i32) {
    %c0_i32 = arith.constant 0 : i32
    %c0_i32_0 = arith.constant 0 : i32
    %c0_i32_1 = arith.constant 0 : i32
    return %c0_i32, %c0_i32_0 : i32, i32
  }
  func.func @transform_2(%arg0: i32) -> (i32, i32) {
    %c0_i32 = arith.constant 0 : i32
    %c0_i32_0 = arith.constant 0 : i32
    %c0_i32_1 = arith.constant 0 : i32
    return %c0_i32, %c0_i32_0 : i32, i32
  }
  func.func @transform_3(%arg0: i32) -> (i32, i32) {
    %c0_i32 = arith.constant 0 : i32
    %c0_i32_0 = arith.constant 0 : i32
    return %arg0, %c0_i32 : i32, i32
  }
}

</mosaic_0001>

<llo_original>
// kernel: model_regression_forward.1
$region0: #{model_regression_forward.1}
  #allocation0 [shape = 'u32[]', space=smem, size = 0x4, offset = 0x4, fixed_abs, tag = 'smem constant byte address 0x4 - core index']
  #allocation1 [shape = 'u32[72,128]{1,0:T(1,128)}', space=vmem, size = 0x9000, scoped, tag = 'internal scratch']
  %s0 = inlined_call_operand.vmem [shape: f32[8,32], index: 0, kind: input, shape index: {}]
  %s1 = inlined_call_operand.vmem [shape: f32[32,128], index: 1, kind: input, shape index: {}]
  %s2 = inlined_call_operand.vmem [shape: f32[1,128], index: 2, kind: input, shape index: {}]
  %s3 = inlined_call_operand.vmem [shape: f32[8,1], index: 3, kind: output, shape index: {}]
  %s4 = sld [smem:[#allocation0]]
  $region22: #{model_regression_forward.1} parent=0
    _
  %s6 = ssub.s32 1, %s4
  %s7 = scalar_select 0, %s6, %s4
  // Predicated region
  $region2: #{model_regression_forward.1} parent=0 // pred_check
    _
  $region3: #{model_regression_forward.1} parent=0 // pred_check_branch
    %9 = sbr.rel (0) target = $region5
  $region4: #{model_regression_forward.1} parent=0 // pred_region
    _
  $region5: #{model_regression_forward.1} parent=0 // pred_fallthru
    _
  // Predicated region
  $region6: #{model_regression_forward.1} parent=0 // pred_check
    _
  $region7: #{model_regression_forward.1} parent=0 // pred_check_branch
    %11 = sbr.rel (0) target = $region9
  $region8: #{model_regression_forward.1} parent=0 // pred_region
    _
  $region9: #{model_regression_forward.1} parent=0 // pred_fallthru
    _
  // Predicated region
  $region10: #{model_regression_forward.1} parent=0 // pred_check
    _
  $region11: #{model_regression_forward.1} parent=0 // pred_check_branch
    %13 = sbr.rel (0) target = $region13
  $region12: #{model_regression_forward.1} parent=0 // pred_region
    _
  $region13: #{model_regression_forward.1} parent=0 // pred_fallthru
    _
  %v14 = vld [vmem:[%s0] sm:$0xff]
  %v15 = vmax.f32 %v14, 0.0
  %v16 = vld [vmem:[%s1] sm:$0xff]
  %v17 = vld [vmem:[%s1 + $0x8] sm:$0xff]
  %v18 = vld [vmem:[%s1 + $0x10] sm:$0xff]
  %v19 = vld [vmem:[%s1 + $0x18] sm:$0xff]
  %v20 = vld [vmem:[%s2] sm:$0x1]
  %v22 = vperm.slane %v20, 0
  %vm24 = vcmask 261120
  %v26 = vsel %vm24, %v15, 0
  %28 = vmatpush.msra.mxu0 0.0
  %29 = vmatpush.msra.mxu0 0.0
  %30 = vmatpush.msra.mxu0 0.0
  %31 = vmatpush.msra.mxu0 0.0
  %32 = vmatpush.msra.mxu0 0.0
  %33 = vmatpush.msra.mxu0 0.0
  %34 = vmatpush.msra.mxu0 0.0
  %35 = vmatpush.msra.mxu0 0.0
  %36 = vmatpush.msra.mxu0 0.0
  %37 = vmatpush.msra.mxu0 0.0
  %38 = vmatpush.msra.mxu0 0.0
  %39 = vmatpush.msra.mxu0 0.0
  %40 = vmatpush.msra.mxu0 %v19
  %41 = vmatpush.msra.mxu0 %v18
  %42 = vmatpush.msra.mxu0 %v17
  %43 = vmatpush.msra.mxu0 %v16
  %44 = vmatmul.f32.gmra.mxu0 %v26
  %v45 = vpop.f32.mrf.mxu0
  %v46 = vadd.f32 %v22, %v45
  %47 = vdwg.mxu0
  %v48 = vmax.f32 %v46, 0.0
  %vm49 = vcmask 7168
  %50 = vst.msk [vmem:[%s3] sm:$0xff] %vm49, %v48
  // Predicated region
  $region14: #{model_regression_forward.1} parent=0 // pred_check
    _
  $region15: #{model_regression_forward.1} parent=0 // pred_check_branch
    %52 = sbr.rel (0) target = $region17
  $region16: #{model_regression_forward.1} parent=0 // pred_region
    _
  $region17: #{model_regression_forward.1} parent=0 // pred_fallthru
    _
  // Predicated region
  $region18: #{model_regression_forward.1} parent=0 // pred_check
    _
  $region19: #{model_regression_forward.1} parent=0 // pred_check_branch
    %54 = sbr.rel (0) target = $region21
  $region20: #{model_regression_forward.1} parent=0 // pred_region
    _
  $region21: #{model_regression_forward.1} parent=0 // pred_fallthru
    _

</llo_original>
